<compile_context>
chip_gen: v7x
topology: tpu7x:2x2x1
jax: 0.10.0
libtpu: 0.0.40
codegen_flags: <defaults>
</compile_context>

<pallas_src>
import functools

import jax
import jax.numpy as jnp
from jax.experimental import pallas as pl
from jax.experimental.pallas import tpu as pltpu


# ----------------------------- small helpers -------------------------------

def _compiler_params(sem, est_bytes):
    """dimension_semantics + a VMEM limit raised (never lowered) to fit blocks."""
    lim = int(min(64 * 1024 * 1024, max(32 * 1024 * 1024, 2 * est_bytes)))
    return pltpu.CompilerParams(dimension_semantics=sem, vmem_limit_bytes=lim)


def _pick_tm(M, cap=512):
    """M tile: MXU-friendly, divides M when possible, >=2 grid steps, bounded."""
    if M <= 16:
        return M, False
    divs = [c for c in range(8, min(cap, M) + 1, 8) if M % c == 0]
    if divs:
        tm = divs[-1]
        for pref in (256, 128):
            p = [c for c in divs if c % pref == 0]
            if p:
                tm = p[-1]
                break
        if tm == M:  # force >=2 grid steps so both v7x TensorCores get work
            halves = [c for c in divs if c <= M // 2]
            if halves:
                tm = halves[-1]
        return tm, False
    # Ragged M: bounded tile + cdiv grid + in-kernel row mask on the last tile.
    return min(cap, ((M + 7) // 8) * 8), True


def _pick_th(H, W, C, budget_elems=4096):
    """Attention row tile: keep m/l/acc (TH*W*C f32 each) vreg-sized; >=2 tiles."""
    best = 1
    for th in range(1, H + 1):
        if H % th == 0 and th * W * C <= budget_elems:
            best = th
    if best == H and H > 1:
        for th in range(H // 2, 0, -1):
            if H % th == 0:
                return th
    return best


def _write_stats(st_ref, y, axes):
    """st_ref block (1, 8, C): row 0 = per-channel sum, row 1 = sum of squares."""
    st_ref[...] = jnp.zeros_like(st_ref)
    st_ref[0, 0:1, :] = jnp.sum(y, axis=axes)[None, :]
    st_ref[0, 1:2, :] = jnp.sum(y * y, axis=axes)[None, :]


def _bn_affine_from_stats(st, n, gamma, beta, eps=1e-5):
    """BatchNorm2d (training-mode batch statistics) as per-channel scale/bias.

    st: (tiles, 8, C) per-tile partials emitted by the producing kernels.
    """
    tot = jnp.sum(st[:, 0, :], axis=0)
    tot2 = jnp.sum(st[:, 1, :], axis=0)
    mean = tot / n
    var = jnp.maximum(tot2 / n - mean * mean, 0.0)
    scale = gamma * jax.lax.rsqrt(var + eps)
    bias = beta - mean * scale
    return scale, bias


# ----------------------------- matmul kernels ------------------------------

def _make_matmul_kernel(n_w, has_affine, stats_flags, ragged, M, tm):
    def kernel(*refs):
        idx = 0
        x_ref = refs[idx]; idx += 1
        if has_affine:
            s_ref, b_ref = refs[idx], refs[idx + 1]
            idx += 2
        w_refs = refs[idx:idx + n_w]; idx += n_w
        out_refs = refs[idx:idx + n_w]; idx += n_w
        st_refs = list(refs[idx:])

        x = x_ref[...].astype(jnp.float32)
        if has_affine:                      # fused BN-affine + ReLU prologue
            x = jnp.maximum(x * s_ref[...] + b_ref[...], 0.0)
        if ragged:                          # mask rows of the final partial tile
            r0 = pl.program_id(0) * tm
            rows = r0 + jax.lax.broadcasted_iota(jnp.int32, (tm, 1), 0)
            x = jnp.where(rows < M, x, 0.0)
        xb = x.astype(jnp.bfloat16)

        si = 0
        for t in range(n_w):
            y = jnp.dot(xb, w_refs[t][...], preferred_element_type=jnp.float32)
            out_refs[t][...] = y.astype(out_refs[t].dtype)
            if stats_flags[t]:
                _write_stats(st_refs[si], y, (0,))
                si += 1
    return kernel


def fused_matmul(x2d, weights, *, scale=None, bias=None, stats=None):
    """Shared-input 1x1 convolutions as one M-tiled bf16 MXU matmul pass.

    x2d: (M, K).  weights: list of (K, Ni) f32 -> list of (M, Ni) bf16 outputs.
    Optional per-channel BN-affine + ReLU prologue on x.  For each weight with
    stats[i]=True, a (tiles, 8, Ni) f32 array of per-tile (sum, sumsq) partials
    is also emitted so BatchNorm never re-reads the activation from HBM.
    Returns (outputs tuple, stats tuple).
    """
    M, K = x2d.shape
    n_w = len(weights)
    stats = [False] * n_w if stats is None else list(stats)
    has_affine = scale is not None
    tm, ragged = _pick_tm(M)
    grid_m = pl.cdiv(M, tm)

    in_specs = [pl.BlockSpec((tm, K), lambda i: (i, 0))]
    args = [x2d]
    est = 2 * tm * K * x2d.dtype.itemsize
    if has_affine:
        vspec = pl.BlockSpec((1, K), lambda i: (0, 0))
        in_specs += [vspec, vspec]
        args += [scale.reshape(1, K).astype(jnp.float32),
                 bias.reshape(1, K).astype(jnp.float32)]
        est += 4 * K * 4

    out_shapes, out_specs = [], []
    for w in weights:
        N = w.shape[1]
        # TODO(synk): mark resident weight blocks pipeline_mode=pl.Buffered(1)
        # (constant index map) to save one weight buffer of VMEM on v7x.
        in_specs.append(pl.BlockSpec((K, N), lambda i: (0, 0)))
        args.append(w.astype(jnp.bfloat16))
        out_shapes.append(jax.ShapeDtypeStruct((M, N), jnp.bfloat16))
        out_specs.append(pl.BlockSpec((tm, N), lambda i: (i, 0)))
        est += 2 * (K * N * 2 + tm * N * 2)
    for t, w in enumerate(weights):
        if stats[t]:
            N = w.shape[1]
            out_shapes.append(jax.ShapeDtypeStruct((grid_m, 8, N), jnp.float32))
            out_specs.append(pl.BlockSpec((1, 8, N), lambda i: (i, 0, 0)))
            est += 2 * 8 * N * 4

    outs = pl.pallas_call(
        _make_matmul_kernel(n_w, has_affine, stats, ragged, M, tm),
        out_shape=tuple(out_shapes),
        grid=(grid_m,),
        in_specs=in_specs,
        out_specs=tuple(out_specs),
        compiler_params=_compiler_params(("parallel",), est),
    )(*args)
    return tuple(outs[:n_w]), tuple(outs[n_w:])


# --------------------------- attention kernel -------------------------------

def _attention_kernel(q_ref, k_ref, v_ref, rel_ref, o_ref, st_ref,
                      kpad_ref, vpad_ref, *, TH, H, W, KH, KW, PH, PW):
    # q_ref/o_ref: (1, TH, W, C) H-tiled; k_ref/v_ref: (1, H, W, C) resident per
    # batch; rel_ref: (KH, KW, C); kpad/vpad: VMEM scratch (Hp, Wp, C) bf16.
    C = q_ref.shape[-1]
    Hp, Wp = H + KH - 1, W + KW - 1
    THp = TH + KH - 1

    # Build the zero-padded k/v halo once per batch image (the scratch persists
    # across the H-tile axis).  Only the halo frame is zeroed; the interior is
    # a single copy from the auto-pipelined k/v blocks.
    @pl.when(pl.program_id(1) == 0)
    def _():
        z_tb = jnp.zeros((PH, Wp, C), k_ref.dtype)
        z_lr = jnp.zeros((H, PW, C), k_ref.dtype)
        for pad_ref, src_ref in ((kpad_ref, k_ref), (vpad_ref, v_ref)):
            pad_ref[0:PH, :, :] = z_tb
            pad_ref[PH + H:Hp, :, :] = z_tb
            pad_ref[PH:PH + H, 0:PW, :] = z_lr
            pad_ref[PH:PH + H, PW + W:Wp, :] = z_lr
            pad_ref[PH:PH + H, PW:PW + W, :] = src_ref[0]

    row0 = pl.multiple_of(pl.program_id(1) * TH, TH)
    q = q_ref[0].astype(jnp.float32)              # (TH, W, C)
    rel = rel_ref[...]                            # (KH, KW, C) f32

    # ---- pass 1: running max over the KH*KW taps; m stays in vregs ----
    m = jnp.full((TH, W, C), -jnp.inf, dtype=jnp.float32)
    for j in range(KW):                           # one shifted load per column tap
        kj = kpad_ref[pl.ds(row0, THp), j:j + W, :]
        for i in range(KH):                       # row slices are free (major axis)
            s = q * (kj[i:i + TH] + rel[i, j])
            m = jnp.maximum(m, s)

    # ---- pass 2: one exp per tap; l/acc accumulate in vregs (no VMEM RMW) ----
    l = jnp.zeros((TH, W, C), dtype=jnp.float32)
    acc = jnp.zeros((TH, W, C), dtype=jnp.float32)
    for j in range(KW):
        kj = kpad_ref[pl.ds(row0, THp), j:j + W, :]
        vj = vpad_ref[pl.ds(row0, THp), j:j + W, :]
        for i in range(KH):
            s = q * (kj[i:i + TH] + rel[i, j])
            p = jnp.exp(s - m)
            l = l + p
            acc = acc + p * vj[i:i + TH]

    # The max tap contributes exp(0)=1, so l >= 1: approx reciprocal is safe.
    out = acc * pl.reciprocal(l, approx=True)
    o_ref[0] = out.astype(o_ref.dtype)
    _write_stats(st_ref, out, (0, 1))             # partial sums for BN2


def attention_conv(q, k, v, rel_hwc, *, KH, KW):
    """q/k/v: (B,H,W,C) bf16 (unpadded); rel_hwc: (KH,KW,C) f32.

    Returns ((B,H,W,C) bf16 output, (B*nTH, 8, C) f32 BN partial sums).
    """
    B, H, W, C = q.shape
    PH, PW = (KH - 1) // 2, (KW - 1) // 2
    Hp, Wp = H + KH - 1, W + KW - 1
    TH = _pick_th(H, W, C)
    nTH = H // TH

    kern = functools.partial(_attention_kernel, TH=TH, H=H, W=W,
                             KH=KH, KW=KW, PH=PH, PW=PW)
    q_spec = pl.BlockSpec((1, TH, W, C), lambda b, t: (b, t, 0, 0))
    kv_spec = pl.BlockSpec((1, H, W, C), lambda b, t: (b, 0, 0, 0))  # resident per batch
    rel_spec = pl.BlockSpec((KH, KW, C), lambda b, t: (0, 0, 0))
    o_spec = pl.BlockSpec((1, TH, W, C), lambda b, t: (b, t, 0, 0))
    st_spec = pl.BlockSpec((1, 8, C), lambda b, t: (b * nTH + t, 0, 0))

    est = (2 * 2 * TH * W * C * 2          # q + out tiles, double buffered, bf16
           + 2 * 2 * H * W * C * 2         # k + v full-image blocks (bf16)
           + 2 * Hp * Wp * C * 2           # padded k/v scratch
           + 2 * KH * KW * C * 4 + 2 * 8 * C * 4)

    out, st = pl.pallas_call(
        kern,
        out_shape=(jax.ShapeDtypeStruct((B, H, W, C), jnp.bfloat16),
                   jax.ShapeDtypeStruct((B * nTH, 8, C), jnp.float32)),
        grid=(B, nTH),
        in_specs=[q_spec, kv_spec, kv_spec, rel_spec],
        out_specs=(o_spec, st_spec),
        scratch_shapes=[pltpu.VMEM((Hp, Wp, C), jnp.bfloat16),
                        pltpu.VMEM((Hp, Wp, C), jnp.bfloat16)],
        compiler_params=_compiler_params(("parallel", "arbitrary"), est),
    )(q, k, v, rel_hwc)
    return out, st


# ------------------- fused BN3 + shortcut-BN + add + ReLU -------------------

def _bn_add_relu_kernel(a_ref, sa_ref, ba_ref, b_ref, sb_ref, bb_ref, o_ref):
    a = a_ref[...].astype(jnp.float32) * sa_ref[...] + ba_ref[...]
    b = b_ref[...].astype(jnp.float32) * sb_ref[...] + bb_ref[...]
    o_ref[...] = jnp.maximum(a + b, 0.0)


def bn_add_relu(a2d, sa, ba, b2d, sb, bb):
    """relu((a*sa+ba) + (b*sb+bb)), per-channel affines, lane-dense + row-tiled."""
    M, C = a2d.shape
    fold = 1
    if C < 128:                      # fold rows into lanes so stores are unmasked
        f = max(1, 128 // C)
        while f > 1 and (M % f) != 0:
            f //= 2
        fold = f
    if fold > 1:
        a2 = a2d.reshape(M // fold, fold * C)
        b2 = b2d.reshape(M // fold, fold * C)
        sa2, ba2 = jnp.tile(sa, fold), jnp.tile(ba, fold)
        sb2, bb2 = jnp.tile(sb, fold), jnp.tile(bb, fold)
    else:
        a2, b2, sa2, ba2, sb2, bb2 = a2d, b2d, sa, ba, sb, bb
    Mf, Cf = a2.shape
    tm, _ = _pick_tm(Mf)
    row = pl.BlockSpec((tm, Cf), lambda i: (i, 0))
    vec = pl.BlockSpec((1, Cf), lambda i: (0, 0))
    r = lambda z: z.reshape(1, Cf).astype(jnp.float32)
    est = 2 * tm * Cf * (a2.dtype.itemsize + b2.dtype.itemsize + 4) + 8 * Cf * 4

    out = pl.pallas_call(
        _bn_add_relu_kernel,
        out_shape=jax.ShapeDtypeStruct((Mf, Cf), jnp.float32),
        grid=(pl.cdiv(Mf, tm),),
        in_specs=[row, vec, vec, row, vec, vec],
        out_specs=row,
        compiler_params=_compiler_params(("parallel",), est),
    )(a2, r(sa2), r(ba2), b2, r(sb2), r(bb2))
    return out.reshape(M, C)


# ------------------------------- JAX glue ----------------------------------

def init_params(key, in_channels, out_channels, stride=1, groups=1,
                base_width=64, expansion=1):
    width = int(out_channels * (base_width / 64.0)) * groups
    assert width % 8 == 0 and width % 2 == 0   # AttentionConv groups=8, rel split
    KH = KW = 7
    ks = jax.random.split(key, 8)

    def kaiming(k, cin, cout):  # kaiming_normal, fan_out, relu (1x1 conv)
        std = (2.0 / cout) ** 0.5
        return std * jax.random.normal(k, (cin, cout), dtype=jnp.float32)

    p = {'width': width, 'c_out': expansion * out_channels}
    p['w_conv1'] = kaiming(ks[0], in_channels, width)
    p['bn1_g'] = jnp.ones((width,), jnp.float32)
    p['bn1_b'] = jnp.zeros((width,), jnp.float32)

    p['w_query'] = kaiming(ks[1], width, width)
    p['w_key'] = kaiming(ks[2], width, width)
    p['w_value'] = kaiming(ks[3], width, width)
    p['rel_h'] = jax.random.normal(ks[4], (width // 2, KH), dtype=jnp.float32)
    p['rel_w'] = jax.random.normal(ks[5], (width // 2, KW), dtype=jnp.float32)
    p['bn2_g'] = jnp.ones((width,), jnp.float32)
    p['bn2_b'] = jnp.zeros((width,), jnp.float32)

    c_out = expansion * out_channels
    p['w_conv3'] = kaiming(ks[6], width, c_out)
    p['bn3_g'] = jnp.ones((c_out,), jnp.float32)
    p['bn3_b'] = jnp.zeros((c_out,), jnp.float32)

    if stride != 1 or in_channels != c_out:
        p['w_sc'] = kaiming(ks[7], in_channels, c_out)
        p['bn_sc_g'] = jnp.ones((c_out,), jnp.float32)
        p['bn_sc_b'] = jnp.zeros((c_out,), jnp.float32)
    return p


def bottleneck_forward(params, x_nchw, *, stride=1):
    # NCHW -> NHWC (channels on the lane axis)
    x = jnp.transpose(x_nchw, (0, 2, 3, 1)).astype(jnp.float32)
    B, H, W, Cin = x.shape
    width = params['width']
    c_out = params['c_out']
    has_sc = 'w_sc' in params
    M = B * H * W
    x2d = x.reshape(M, Cin)

    # ---- conv1 (+ shortcut conv fused when both read the same x) ----
    if has_sc and stride == 1:
        (h1, sc2d), (st1, st_sc) = fused_matmul(
            x2d, [params['w_conv1'], params['w_sc']], stats=[True, True])
        n_sc = M
    else:
        (h1,), (st1,) = fused_matmul(x2d, [params['w_conv1']], stats=[True])
        if has_sc:
            assert H % stride == 0 and W % stride == 0
            xs = x[:, ::stride, ::stride, :]
            n_sc = xs.shape[0] * xs.shape[1] * xs.shape[2]
            (sc2d,), (st_sc,) = fused_matmul(xs.reshape(n_sc, Cin),
                                             [params['w_sc']], stats=[True])
        else:
            sc2d, st_sc, n_sc = x2d, None, M      # identity shortcut (f32)

    # BN1 (batch statistics) -> affine, applied (with ReLU) inside the qkv matmul.
    s1, b1 = _bn_affine_from_stats(st1, M, params['bn1_g'], params['bn1_b'])

    # ---- conv2: fused q/k/v projection + AttentionConv(7x7, pad 3) ----
    KH = KW = 7
    (q2d, k2d, v2d), _ = fused_matmul(
        h1, [params['w_query'], params['w_key'], params['w_value']],
        scale=s1, bias=b1)
    q = q2d.reshape(B, H, W, width)
    k = k2d.reshape(B, H, W, width)
    v = v2d.reshape(B, H, W, width)

    # relative position bias: first width//2 channels use rel_h (broadcast over
    # kernel width), last width//2 use rel_w (broadcast over kernel height).
    rel_h_full = jnp.broadcast_to(params['rel_h'][:, :, None], (width // 2, KH, KW))
    rel_w_full = jnp.broadcast_to(params['rel_w'][:, None, :], (width // 2, KH, KW))
    rel_hwc = jnp.transpose(jnp.concatenate([rel_h_full, rel_w_full], axis=0),
                            (1, 2, 0)).astype(jnp.float32)      # (KH, KW, width)

    h2, st2 = attention_conv(q, k, v, rel_hwc, KH=KH, KW=KW)    # (B,H,W,width) bf16
    s2, b2 = _bn_affine_from_stats(st2, M, params['bn2_g'], params['bn2_b'])

    # ---- conv3 (BN2 affine + ReLU fused into its prologue) ----
    (h3,), (st3,) = fused_matmul(h2.reshape(M, width), [params['w_conv3']],
                                 scale=s2, bias=b2, stats=[True])
    # BN3 statistics are computed pre-pool (PyTorch op order); the affine
    # commutes with avg-pool, so pool the raw activation and fold the affine
    # into the final fused kernel.
    s3, b3 = _bn_affine_from_stats(st3, M, params['bn3_g'], params['bn3_b'])

    if stride >= 2:          # F.avg_pool2d(out, (stride, stride))
        assert H % stride == 0 and W % stride == 0
        Ho, Wo = H // stride, W // stride
        # TODO(synk): fuse the avg-pool into the bn_add_relu kernel by reading
        # stride-blocked h3 tiles (saves one full-resolution HBM pass).
        h3_eff = (h3.reshape(B, Ho, stride, Wo, stride, c_out)
                  .astype(jnp.float32).mean(axis=(2, 4))
                  .astype(jnp.bfloat16).reshape(B * Ho * Wo, c_out))
    else:
        Ho, Wo = H, W
        h3_eff = h3

    if has_sc:
        s_sc, b_sc = _bn_affine_from_stats(st_sc, n_sc,
                                           params['bn_sc_g'], params['bn_sc_b'])
    else:
        s_sc = jnp.ones((c_out,), jnp.float32)
        b_sc = jnp.zeros((c_out,), jnp.float32)

    # BN3 + shortcut-BN + residual add + ReLU in a single lane-dense kernel.
    out2d = bn_add_relu(h3_eff, s3, b3, sc2d, s_sc, b_sc)
    out = out2d.reshape(B, Ho, Wo, c_out)
    return jnp.transpose(out, (0, 3, 1, 2))       # NHWC -> NCHW


# --------------------------------- main -------------------------------------

if __name__ == "__main__":
    B, Cin, H, W = 2, 8, 8, 8
    Cout = 16          # -> width = 16 (divisible by 8 and 2)
    stride = 1

    key = jax.random.PRNGKey(0)
    x = jax.random.normal(key, (B, Cin, H, W), dtype=jnp.float32)
    params = init_params(jax.random.PRNGKey(1), Cin, Cout, stride=stride)

    out = bottleneck_forward(params, x, stride=stride)
    out = jax.block_until_ready(out)

    assert out.shape == (B, Cout, H, W), out.shape
    assert bool(jnp.all(jnp.isfinite(out)))
    assert bool(jnp.all(out >= 0.0))  # final ReLU
    print("KERNEL_OK")
</pallas_src>

<mosaic_0001>
module attributes {stable_mosaic.version = 11 : i64} {
  func.func @kernel(%arg0: i32, %arg1: memref<64x8xf32, #tpu.memory_space<vmem>>, %arg2: memref<8x16xbf16, #tpu.memory_space<vmem>>, %arg3: memref<8x16xbf16, #tpu.memory_space<vmem>>, %arg4: memref<64x16xbf16, #tpu.memory_space<vmem>>, %arg5: memref<64x16xbf16, #tpu.memory_space<vmem>>, %arg6: memref<1x8x16xf32, #tpu.memory_space<vmem>>, %arg7: memref<1x8x16xf32, #tpu.memory_space<vmem>>) attributes {dimension_semantics = [#tpu.dimension_semantics<parallel>], iteration_bounds = array<i64: 2>, scalar_prefetch = 0 : i64, scratch_operands = 0 : i64, tpu.core_type = #tpu.core_type<tc>, window_params = [{transform_indices = @transform_0, window_bounds = array<i64: 64, 8>}, {pipeline_mode = #tpu.pipeline_mode<synchronous>, transform_indices = @transform_1, window_bounds = array<i64: 8, 16>}, {pipeline_mode = #tpu.pipeline_mode<synchronous>, transform_indices = @transform_2, window_bounds = array<i64: 8, 16>}, {transform_indices = @transform_3, window_bounds = array<i64: 64, 16>}, {transform_indices = @transform_4, window_bounds = array<i64: 64, 16>}, {transform_indices = @transform_5, window_bounds = array<i64: 1, 8, 16>}, {transform_indices = @transform_6, window_bounds = array<i64: 1, 8, 16>}]} {
    %c0 = arith.constant 0 : index
    %c0_0 = arith.constant 0 : index
    %0 = vector.load %arg1[%c0, %c0_0] : memref<64x8xf32, #tpu.memory_space<vmem>>, vector<64x8xf32>
    %1 = arith.truncf %0 : vector<64x8xf32> to vector<64x8xbf16>
    %c0_1 = arith.constant 0 : index
    %c0_2 = arith.constant 0 : index
    %2 = vector.load %arg2[%c0_1, %c0_2] : memref<8x16xbf16, #tpu.memory_space<vmem>>, vector<8x16xbf16>
    %cst = arith.constant dense<0.000000e+00> : vector<64x16xf32>
    %3 = tpu.matmul %1, %2, %cst {dimension_numbers = #tpu.dot_dimension_numbers<[1], [0], [0], [1], [0, 0, 1, 1], [], []>} : vector<64x8xbf16>, vector<8x16xbf16>, vector<64x16xf32> -> vector<64x16xf32>
    %4 = arith.truncf %3 : vector<64x16xf32> to vector<64x16xbf16>
    %c0_3 = arith.constant 0 : index
    %c0_4 = arith.constant 0 : index
    %5 = vector.load %arg4[%c0_3, %c0_4] : memref<64x16xbf16, #tpu.memory_space<vmem>>, vector<64x16xbf16>
    tpu.vector_store %arg4[%c0_3, %c0_4], %4 {strides = array<i32>} : memref<64x16xbf16, #tpu.memory_space<vmem>>, vector<64x16xbf16>,
    %cst_5 = arith.constant 0.000000e+00 : f32
    %6 = vector.broadcast %cst_5 : f32 to vector<1x8x16xf32>
    %c0_6 = arith.constant 0 : index
    %c0_7 = arith.constant 0 : index
    %c0_8 = arith.constant 0 : index
    %7 = vector.load %arg6[%c0_6, %c0_7, %c0_8] : memref<1x8x16xf32, #tpu.memory_space<vmem>>, vector<1x8x16xf32>
    tpu.vector_store %arg6[%c0_6, %c0_7, %c0_8], %6 {strides = array<i32>} : memref<1x8x16xf32, #tpu.memory_space<vmem>>, vector<1x8x16xf32>,
    %cst_9 = arith.constant dense<0.000000e+00> : vector<16xf32>
    %8 = vector.multi_reduction <add>, %3, %cst_9 [0] : vector<64x16xf32> to vector<16xf32>
    %9 = vector.shape_cast %8 : vector<16xf32> to vector<1x16xf32>
    %c0_10 = arith.constant 0 : index
    %c0_11 = arith.constant 0 : index
    %c0_12 = arith.constant 0 : index
    %10 = vector.load %arg6[%c0_10, %c0_11, %c0_12] : memref<1x8x16xf32, #tpu.memory_space<vmem>>, vector<1x1x16xf32>
    %11 = vector.shape_cast %10 : vector<1x1x16xf32> to vector<1x16xf32>
    %12 = vector.shape_cast %9 : vector<1x16xf32> to vector<1x1x16xf32>
    tpu.vector_store %arg6[%c0_10, %c0_11, %c0_12], %12 {strides = array<i32>} : memref<1x8x16xf32, #tpu.memory_space<vmem>>, vector<1x1x16xf32>,
    %13 = arith.mulf %3, %3 : vector<64x16xf32>
    %cst_13 = arith.constant dense<0.000000e+00> : vector<16xf32>
    %14 = vector.multi_reduction <add>, %13, %cst_13 [0] : vector<64x16xf32> to vector<16xf32>
    %15 = vector.shape_cast %14 : vector<16xf32> to vector<1x16xf32>
    %c0_14 = arith.constant 0 : index
    %c1 = arith.constant 1 : index
    %c0_15 = arith.constant 0 : index
    %16 = vector.load %arg6[%c0_14, %c1, %c0_15] : memref<1x8x16xf32, #tpu.memory_space<vmem>>, vector<1x1x16xf32>
    %17 = vector.shape_cast %16 : vector<1x1x16xf32> to vector<1x16xf32>
    %18 = vector.shape_cast %15 : vector<1x16xf32> to vector<1x1x16xf32>
    tpu.vector_store %arg6[%c0_14, %c1, %c0_15], %18 {strides = array<i32>} : memref<1x8x16xf32, #tpu.memory_space<vmem>>, vector<1x1x16xf32>,
    %c0_16 = arith.constant 0 : index
    %c0_17 = arith.constant 0 : index
    %19 = vector.load %arg3[%c0_16, %c0_17] : memref<8x16xbf16, #tpu.memory_space<vmem>>, vector<8x16xbf16>
    %cst_18 = arith.constant dense<0.000000e+00> : vector<64x16xf32>
    %20 = tpu.matmul %1, %19, %cst_18 {dimension_numbers = #tpu.dot_dimension_numbers<[1], [0], [0], [1], [0, 0, 1, 1], [], []>} : vector<64x8xbf16>, vector<8x16xbf16>, vector<64x16xf32> -> vector<64x16xf32>
    %21 = arith.truncf %20 : vector<64x16xf32> to vector<64x16xbf16>
    %c0_19 = arith.constant 0 : index
    %c0_20 = arith.constant 0 : index
    %22 = vector.load %arg5[%c0_19, %c0_20] : memref<64x16xbf16, #tpu.memory_space<vmem>>, vector<64x16xbf16>
    tpu.vector_store %arg5[%c0_19, %c0_20], %21 {strides = array<i32>} : memref<64x16xbf16, #tpu.memory_space<vmem>>, vector<64x16xbf16>,
    %cst_21 = arith.constant 0.000000e+00 : f32
    %23 = vector.broadcast %cst_21 : f32 to vector<1x8x16xf32>
    %c0_22 = arith.constant 0 : index
    %c0_23 = arith.constant 0 : index
    %c0_24 = arith.constant 0 : index
    %24 = vector.load %arg7[%c0_22, %c0_23, %c0_24] : memref<1x8x16xf32, #tpu.memory_space<vmem>>, vector<1x8x16xf32>
    tpu.vector_store %arg7[%c0_22, %c0_23, %c0_24], %23 {strides = array<i32>} : memref<1x8x16xf32, #tpu.memory_space<vmem>>, vector<1x8x16xf32>,
    %cst_25 = arith.constant dense<0.000000e+00> : vector<16xf32>
    %25 = vector.multi_reduction <add>, %20, %cst_25 [0] : vector<64x16xf32> to vector<16xf32>
    %26 = vector.shape_cast %25 : vector<16xf32> to vector<1x16xf32>
    %c0_26 = arith.constant 0 : index
    %c0_27 = arith.constant 0 : index
    %c0_28 = arith.constant 0 : index
    %27 = vector.load %arg7[%c0_26, %c0_27, %c0_28] : memref<1x8x16xf32, #tpu.memory_space<vmem>>, vector<1x1x16xf32>
    %28 = vector.shape_cast %27 : vector<1x1x16xf32> to vector<1x16xf32>
    %29 = vector.shape_cast %26 : vector<1x16xf32> to vector<1x1x16xf32>
    tpu.vector_store %arg7[%c0_26, %c0_27, %c0_28], %29 {strides = array<i32>} : memref<1x8x16xf32, #tpu.memory_space<vmem>>, vector<1x1x16xf32>,
    %30 = arith.mulf %20, %20 : vector<64x16xf32>
    %cst_29 = arith.constant dense<0.000000e+00> : vector<16xf32>
    %31 = vector.multi_reduction <add>, %30, %cst_29 [0] : vector<64x16xf32> to vector<16xf32>
    %32 = vector.shape_cast %31 : vector<16xf32> to vector<1x16xf32>
    %c0_30 = arith.constant 0 : index
    %c1_31 = arith.constant 1 : index
    %c0_32 = arith.constant 0 : index
    %33 = vector.load %arg7[%c0_30, %c1_31, %c0_32] : memref<1x8x16xf32, #tpu.memory_space<vmem>>, vector<1x1x16xf32>
    %34 = vector.shape_cast %33 : vector<1x1x16xf32> to vector<1x16xf32>
    %35 = vector.shape_cast %32 : vector<1x16xf32> to vector<1x1x16xf32>
    tpu.vector_store %arg7[%c0_30, %c1_31, %c0_32], %35 {strides = array<i32>} : memref<1x8x16xf32, #tpu.memory_space<vmem>>, vector<1x1x16xf32>,
    return
  }
  func.func @transform_0(%arg0: i32) -> (i32, i32) {
    %c0_i32 = arith.constant 0 : i32
    %c0_i32_0 = arith.constant 0 : i32
    return %arg0, %c0_i32 : i32, i32
  }
  func.func @transform_1(%arg0: i32) -> (i32, i32) {
    %c0_i32 = arith.constant 0 : i32
    %c0_i32_0 = arith.constant 0 : i32
    %c0_i32_1 = arith.constant 0 : i32
    return %c0_i32, %c0_i32_0 : i32, i32
  }
  func.func @transform_2(%arg0: i32) -> (i32, i32) {
    %c0_i32 = arith.constant 0 : i32
    %c0_i32_0 = arith.constant 0 : i32
    %c0_i32_1 = arith.constant 0 : i32
    return %c0_i32, %c0_i32_0 : i32, i32
  }
  func.func @transform_3(%arg0: i32) -> (i32, i32) {
    %c0_i32 = arith.constant 0 : i32
    %c0_i32_0 = arith.constant 0 : i32
    return %arg0, %c0_i32 : i32, i32
  }
  func.func @transform_4(%arg0: i32) -> (i32, i32) {
    %c0_i32 = arith.constant 0 : i32
    %c0_i32_0 = arith.constant 0 : i32
    return %arg0, %c0_i32 : i32, i32
  }
  func.func @transform_5(%arg0: i32) -> (i32, i32, i32) {
    %c0_i32 = arith.constant 0 : i32
    %c0_i32_0 = arith.constant 0 : i32
    %c0_i32_1 = arith.constant 0 : i32
    return %arg0, %c0_i32, %c0_i32_0 : i32, i32, i32
  }
  func.func @transform_6(%arg0: i32) -> (i32, i32, i32) {
    %c0_i32 = arith.constant 0 : i32
    %c0_i32_0 = arith.constant 0 : i32
    %c0_i32_1 = arith.constant 0 : i32
    return %arg0, %c0_i32, %c0_i32_0 : i32, i32, i32
  }
}

</mosaic_0001>

<llo_original>
// kernel: tpu_custom_call.1
$region0: #{tpu_custom_call.1}
  #allocation0 [shape = 'u32[]', space=smem, size = 0x4, offset = 0x4, fixed_abs, tag = 'smem constant byte address 0x4 - core index']
  #allocation1 [shape = 'u32[144,128]{1,0:T(1,128)}', space=vmem, size = 0x12000, scoped, tag = 'internal scratch']
  %s0 = inlined_call_operand.vmem [shape: f32[128,8], index: 0, kind: input, shape index: {}]
  %s1 = inlined_call_operand.vmem [shape: bf16[8,16], index: 1, kind: input, shape index: {}]
  %s2 = inlined_call_operand.vmem [shape: bf16[8,16], index: 2, kind: input, shape index: {}]
  %s3 = inlined_call_operand.vmem [shape: bf16[128,16], index: 3, kind: output, shape index: {0}]
  %s4 = inlined_call_operand.vmem [shape: bf16[128,16], index: 4, kind: output, shape index: {1}]
  %s5 = inlined_call_operand.hbm [shape: f32[2,8,16], index: 5, kind: output, shape index: {2}]
  %s6 = inlined_call_operand.hbm [shape: f32[2,8,16], index: 6, kind: output, shape index: {3}]
  %7 = xla_tuple %s3, %s4, %s5, %s6
  %s8 = sld [smem:[#allocation0]]
  $region69: #{tpu_custom_call.1} parent=0
    _
  %s10 = ssub.s32 1, %s8
  %s11 = scalar_select 0, %s10, %s8
  $region1: #{tpu_custom_call.1} parent=0
    #allocation2 [shape = 'u8[8192]{0}', space=vmem, size = 0x2000, scoped, tag = 'output window, operand 2']
    #allocation3 [shape = 's32[2]{0}', space=sflag, size = 0x8, scoped, tag = 'scoped memory for tpu_custom_call.1']
    #allocation4 [shape = 'u8[8192]{0}', space=vmem, size = 0x2000, scoped, tag = 'output window, operand 3']
    #allocation5 [shape = 's32[2]{0}', space=sflag, size = 0x8, scoped, tag = 'scoped memory for tpu_custom_call.1']
    %12 = vsyncpa [#allocation3], 0
    %s13 = scalar_lea.sflag [#allocation3], 1
    %14 = vsyncpa %s13, 0
    %15 = vsyncpa [#allocation5], 0
    %s16 = scalar_lea.sflag [#allocation5], 1
    %17 = vsyncpa %s16, 0
    loop: start=0, step=1, limit=4
    $region2: #{tpu_custom_call.1} parent=1 // loop_pre_header
      _
    $region3: #{tpu_custom_call.1} parent=1 // loop_header
      %s19 = sphi 0, %s23
      %p20 = scmp.ge.s32.totalorder %s19, 4
      %s29 = sphi 0, %s31
      %s32 = sphi 0, %s29
      %s33 = sphi 0, %s32
      %s49 = sphi 0, %s33
      %s53 = sphi 0, %s53
      %s55 = sphi 0, %s53
      %s56 = sphi 0, %s55
      %s70 = sphi 0, %s56
      %s74 = sphi 0, %s74
      %s76 = sphi 0, %s74
      %s77 = sphi 0, %s76
      %s91 = sphi 0, %s77
      %s97 = sphi 0, %s99
      %s100 = sphi 0, %s97
      %s101 = sphi 0, %s100
      %s117 = sphi 0, %s101
      %s123 = sphi 0, %s125
      %s126 = sphi 0, %s123
      %s127 = sphi 0, %s126
      %s143 = sphi 0, %s127
      %s149 = sphi 0, %s151
      %s152 = sphi 0, %s149
      %s153 = sphi 0, %s152
      %s169 = sphi 0, %s153
      %s175 = sphi 0, %s177
      %s178 = sphi 0, %s175
      %s179 = sphi 0, %s178
      %s195 = sphi 0, %s179
    $region4: #{tpu_custom_call.1} parent=1 // loop_header_branch
      %22 = sbr.rel (%p20) target = $region8
    $region5: #{tpu_custom_call.1} parent=1 // loop_body
      %s24 = ssub.s32 %s19, 1
      %s25 = ssub.s32 %s19, 2
      %s26 = sadd.s32 %s19, 1
      %s27 = ssub.s32 %s19, %s26
      %p28 = scmp.eq.s32.totalorder %s27, 0
      %s30 = sadd.s32 %s29, 1
      %s31 = scalar_select %p28, %s29, %s30
      %p34 = pneg %p28
      %p35 = scmp.eq.s32.totalorder %s19, 1
      %p36 = por %p34, %p35
      %p37 = scmp.ne.s32.totalorder %s29, %s32
      %p38 = scmp.eq.s32.totalorder %s19, 0
      %p39 = por %p37, %p38
      %p40 = scmp.ne.s32.totalorder %s29, %s32
      %p41 = scmp.eq.s32.totalorder %s24, 1
      %p42 = por %p40, %p41
      %p43 = scmp.ne.s32.totalorder %s32, %s33
      %p44 = scmp.eq.s32.totalorder %s24, 0
      %p45 = por %p43, %p44
      %p46 = scmp.ne.s32.totalorder %s32, %s33
      %p47 = scmp.eq.s32.totalorder %s25, 1
      %p48 = por %p46, %p47
      %p50 = scmp.ne.s32.totalorder %s33, %s49
      %p51 = scmp.eq.s32.totalorder %s25, 0
      %p52 = por %p50, %p51
      %s54 = sadd.s32 %s53, 1
      %p57 = scmp.eq.s32.totalorder %s19, 1
      %p58 = scmp.ne.s32.totalorder %s53, %s55
      %p59 = scmp.eq.s32.totalorder %s19, 0
      %p60 = por %p58, %p59
      %p61 = scmp.ne.s32.totalorder %s53, %s55
      %p62 = scmp.eq.s32.totalorder %s24, 1
      %p63 = por %p61, %p62
      %p64 = scmp.ne.s32.totalorder %s55, %s56
      %p65 = scmp.eq.s32.totalorder %s24, 0
      %p66 = por %p64, %p65
      %p67 = scmp.ne.s32.totalorder %s55, %s56
      %p68 = scmp.eq.s32.totalorder %s25, 1
      %p69 = por %p67, %p68
      %p71 = scmp.ne.s32.totalorder %s56, %s70
      %p72 = scmp.eq.s32.totalorder %s25, 0
      %p73 = por %p71, %p72
      %s75 = sadd.s32 %s74, 1
      %p78 = scmp.eq.s32.totalorder %s19, 1
      %p79 = scmp.ne.s32.totalorder %s74, %s76
      %p80 = scmp.eq.s32.totalorder %s19, 0
      %p81 = por %p79, %p80
      %p82 = scmp.ne.s32.totalorder %s74, %s76
      %p83 = scmp.eq.s32.totalorder %s24, 1
      %p84 = por %p82, %p83
      %p85 = scmp.ne.s32.totalorder %s76, %s77
      %p86 = scmp.eq.s32.totalorder %s24, 0
      %p87 = por %p85, %p86
      %p88 = scmp.ne.s32.totalorder %s76, %s77
      %p89 = scmp.eq.s32.totalorder %s25, 1
      %p90 = por %p88, %p89
      %p92 = scmp.ne.s32.totalorder %s77, %s91
      %p93 = scmp.eq.s32.totalorder %s25, 0
      %p94 = por %p92, %p93
      %s95 = ssub.s32 %s19, %s26
      %p96 = scmp.eq.s32.totalorder %s95, 0
      %s98 = sadd.s32 %s97, 1
      %s99 = scalar_select %p96, %s97, %s98
      %p102 = pneg %p96
      %p103 = scmp.eq.s32.totalorder %s19, 1
      %p104 = por %p102, %p103
      %p105 = scmp.ne.s32.totalorder %s97, %s100
      %p106 = scmp.eq.s32.totalorder %s19, 0
      %p107 = por %p105, %p106
      %p108 = scmp.ne.s32.totalorder %s97, %s100
      %p109 = scmp.eq.s32.totalorder %s24, 1
      %p110 = por %p108, %p109
      %p111 = scmp.ne.s32.totalorder %s100, %s101
      %p112 = scmp.eq.s32.totalorder %s24, 0
      %p113 = por %p111, %p112
      %p114 = scmp.ne.s32.totalorder %s100, %s101
      %p115 = scmp.eq.s32.totalorder %s25, 1
      %p116 = por %p114, %p115
      %p118 = scmp.ne.s32.totalorder %s101, %s117
      %p119 = scmp.eq.s32.totalorder %s25, 0
      %p120 = por %p118, %p119
      %s121 = ssub.s32 %s19, %s26
      %p122 = scmp.eq.s32.totalorder %s121, 0
      %s124 = sadd.s32 %s123, 1
      %s125 = scalar_select %p122, %s123, %s124
      %p128 = pneg %p122
      %p129 = scmp.eq.s32.totalorder %s19, 1
      %p130 = por %p128, %p129
      %p131 = scmp.ne.s32.totalorder %s123, %s126
      %p132 = scmp.eq.s32.totalorder %s19, 0
      %p133 = por %p131, %p132
      %p134 = scmp.ne.s32.totalorder %s123, %s126
      %p135 = scmp.eq.s32.totalorder %s24, 1
      %p136 = por %p134, %p135
      %p137 = scmp.ne.s32.totalorder %s126, %s127
      %p138 = scmp.eq.s32.totalorder %s24, 0
      %p139 = por %p137, %p138
      %p140 = scmp.ne.s32.totalorder %s126, %s127
      %p141 = scmp.eq.s32.totalorder %s25, 1
      %p142 = por %p140, %p141
      %p144 = scmp.ne.s32.totalorder %s127, %s143
      %p145 = scmp.eq.s32.totalorder %s25, 0
      %p146 = por %p144, %p145
      %s147 = ssub.s32 %s19, %s26
      %p148 = scmp.eq.s32.totalorder %s147, 0
      %s150 = sadd.s32 %s149, 1
      %s151 = scalar_select %p148, %s149, %s150
      %p154 = pneg %p148
      %p155 = scmp.eq.s32.totalorder %s19, 1
      %p156 = por %p154, %p155
      %p157 = scmp.ne.s32.totalorder %s149, %s152
      %p158 = scmp.eq.s32.totalorder %s19, 0
      %p159 = por %p157, %p158
      %p160 = scmp.ne.s32.totalorder %s149, %s152
      %p161 = scmp.eq.s32.totalorder %s24, 1
      %p162 = por %p160, %p161
      %p163 = scmp.ne.s32.totalorder %s152, %s153
      %p164 = scmp.eq.s32.totalorder %s24, 0
      %p165 = por %p163, %p164
      %p166 = scmp.ne.s32.totalorder %s152, %s153
      %p167 = scmp.eq.s32.totalorder %s25, 1
      %p168 = por %p166, %p167
      %p170 = scmp.ne.s32.totalorder %s153, %s169
      %p171 = scmp.eq.s32.totalorder %s25, 0
      %p172 = por %p170, %p171
      %s173 = ssub.s32 %s19, %s26
      %p174 = scmp.eq.s32.totalorder %s173, 0
      %s176 = sadd.s32 %s175, 1
      %s177 = scalar_select %p174, %s175, %s176
      %p180 = pneg %p174
      %p181 = scmp.eq.s32.totalorder %s19, 1
      %p182 = por %p180, %p181
      %p183 = scmp.ne.s32.totalorder %s175, %s178
      %p184 = scmp.eq.s32.totalorder %s19, 0
      %p185 = por %p183, %p184
      %p186 = scmp.ne.s32.totalorder %s175, %s178
      %p187 = scmp.eq.s32.totalorder %s24, 1
      %p188 = por %p186, %p187
      %p189 = scmp.ne.s32.totalorder %s178, %s179
      %p190 = scmp.eq.s32.totalorder %s24, 0
      %p191 = por %p189, %p190
      %p192 = scmp.ne.s32.totalorder %s178, %s179
      %p193 = scmp.eq.s32.totalorder %s25, 1
      %p194 = por %p192, %p193
      %p196 = scmp.ne.s32.totalorder %s179, %s195
      %p197 = scmp.eq.s32.totalorder %s25, 0
      %p198 = por %p196, %p197
      %p199 = scmp.le.s32.totalorder 1, %s19
      %p200 = scmp.lt.s32.totalorder %s19, 3
      %p201 = pnand %p199, %p200
      %p202 = pneg %p201
      // Predicated region
      $region9: #{tpu_custom_call.1} parent=5 // pred_check
        _
      $region10: #{tpu_custom_call.1} parent=5 // pred_check_branch
        %204 = sbr.rel (%p201) target = $region12
      $region11: #{tpu_custom_call.1} parent=5 // pred_region
        %s205 = ssub.s32 %s19, 1
        // Predicated region
        $region13: #{tpu_custom_call.1} parent=11 // pred_check
          %p206 = pneg %p66
        $region14: #{tpu_custom_call.1} parent=11 // pred_check_branch
          %208 = sbr.rel (%p206) target = $region16
        $region15: #{tpu_custom_call.1} parent=11 // pred_region
          _
        $region16: #{tpu_custom_call.1} parent=11 // pred_fallthru
          _
        // Predicated region
        $region17: #{tpu_custom_call.1} parent=11 // pred_check
          %p209 = pneg %p87
        $region18: #{tpu_custom_call.1} parent=11 // pred_check_branch
          %211 = sbr.rel (%p209) target = $region20
        $region19: #{tpu_custom_call.1} parent=11 // pred_region
          _
        $region20: #{tpu_custom_call.1} parent=11 // pred_fallthru
          _
      $region12: #{tpu_custom_call.1} parent=5 // pred_fallthru
        _
      %p212 = scmp.lt.s32.totalorder %s19, 2
      // Predicated region
      $region21: #{tpu_custom_call.1} parent=5 // pred_check
        %p213 = pneg %p212
      $region22: #{tpu_custom_call.1} parent=5 // pred_check_branch
        %215 = sbr.rel (%p213) target = $region24
      $region23: #{tpu_custom_call.1} parent=5 // pred_region
        // Predicated region
        $region25: #{tpu_custom_call.1} parent=23 // pred_check
          %p216 = pneg %p39
        $region26: #{tpu_custom_call.1} parent=23 // pred_check_branch
          %218 = sbr.rel (%p216) target = $region28
        $region27: #{tpu_custom_call.1} parent=23 // pred_region
          %s219 = smul.u32 8, %s19
          %p220 = scmp.lt.s32.totalorder %s219, 15
          %s221 = scalar_select %p220, %s219, 15
          %s222 = smul.addr %s221, 8
          %s223 = scalar_lea.vmem %s0, %s222
          %s224 = smul.u32 8, %s19
        $region28: #{tpu_custom_call.1} parent=23 // pred_fallthru
          _
      $region24: #{tpu_custom_call.1} parent=5 // pred_fallthru
        _
      %p225 = scmp.le.s32.totalorder 1, %s19
      %p226 = scmp.lt.s32.totalorder %s19, 3
      %p227 = pnand %p225, %p226
      %p228 = pneg %p227
      // Predicated region
      $region29: #{tpu_custom_call.1} parent=5 // pred_check
        _
      $region30: #{tpu_custom_call.1} parent=5 // pred_check_branch
        %230 = sbr.rel (%p227) target = $region32
      $region31: #{tpu_custom_call.1} parent=5 // pred_region
        %s231 = ssub.s32 %s19, 1
        %s232 = smul.u32 8, %s24
        %p233 = scmp.lt.s32.totalorder %s232, 15
        %s234 = scalar_select %p233, %s232, 15
        %s235 = smul.addr %s234, 8
        %s236 = scalar_lea.vmem %s0, %s235
        %p237 = pneg %p45
        %p238 = pneg %p42
        %p239 = pneg %p66
        %p240 = pneg %p63
        %p241 = pneg %p87
        %p242 = pneg %p84
        %p243 = pneg %p113
        %p244 = pneg %p110
        %s245 = smul.u32 8, %s24
        %p246 = scmp.lt.s32.totalorder %s245, 15
        %s247 = scalar_select %p246, %s245, 15
        %s248 = smul.addr %s247, 4
        %s249 = scalar_lea.vmem %s3, %s248
        %p250 = pneg %p139
        %p251 = pneg %p136
        %s252 = smul.u32 8, %s24
        %p253 = scmp.lt.s32.totalorder %s252, 15
        %s254 = scalar_select %p253, %s252, 15
        %s255 = smul.addr %s254, 4
        %s256 = scalar_lea.vmem %s4, %s255
        %p257 = pneg %p165
        %p258 = pneg %p162
        %s259 = sand.u32 %s152, 1
        %s260 = scalar_lea.sflag [#allocation3], %s259
        %s261 = sand.u32 %s152, 1
        %s262 = smul.addr %s261, 8
        %s263 = scalar_lea.vmem [#allocation2], %s262
        %p264 = pneg %p191
        %p265 = pneg %p188
        %s266 = sand.u32 %s178, 1
        %s267 = scalar_lea.sflag [#allocation5], %s266
        %s268 = sand.u32 %s178, 1
        %s269 = smul.addr %s268, 8
        %s270 = scalar_lea.vmem [#allocation4], %s269
        %s271 = smul.u32 8, %s24
        %p272 = scmp.lt.s32.totalorder %s271, 15
        %s273 = scalar_select %p272, %s271, 15
        %s274 = smul.addr %s273, 8
        %s275 = scalar_lea.vmem %s0, %s274
        %s276 = smul.u32 8, %s24
        %s277 = smul.u32 8, %s24
        %p278 = scmp.lt.s32.totalorder %s277, 15
        %s279 = scalar_select %p278, %s277, 15
        %s280 = smul.addr %s279, 4
        %s281 = scalar_lea.vmem %s3, %s280
        %s282 = smul.u32 8, %s24
        %s283 = smul.u32 8, %s24
        %p284 = scmp.lt.s32.totalorder %s283, 15
        %s285 = scalar_select %p284, %s283, 15
        %s286 = smul.addr %s285, 4
        %s287 = scalar_lea.vmem %s4, %s286
        %s288 = smul.u32 8, %s24
        %v290 = vld [vmem:[%s275] sm:$0xff]
        %v291 = vld [vmem:[%s275 + $0x8] sm:$0xff]
        %v292 = vld [vmem:[%s275 + $0x10] sm:$0xff]
        %v293 = vld [vmem:[%s275 + $0x18] sm:$0xff]
        %v294 = vld [vmem:[%s275 + $0x20] sm:$0xff]
        %v295 = vld [vmem:[%s275 + $0x28] sm:$0xff]
        %v296 = vld [vmem:[%s275 + $0x30] sm:$0xff]
        %v297 = vld [vmem:[%s275 + $0x38] sm:$0xff]
        %v298 = vpack.c.bf16 %v291, %v290
        %v299 = vpack.c.bf16 %v293, %v292
        %v300 = vpack.c.bf16 %v295, %v294
        %v301 = vpack.c.bf16 %v297, %v296
        %v302 = vld [vmem:[%s1] sm:$0xf]
        %vm303 = vcmask 64512
        %v305 = vsel %vm303, %v298, 0
        %v308 = vsel %vm303, %v299, 0
        %v311 = vsel %vm303, %v300, 0
        %v314 = vsel %vm303, %v301, 0
        %vm316 = vcmask 1043456
        %v318 = vsel %vm316, %v302, 0
        %320 = vmatprep.subr.bf16.mxu0 0
        %321 = vmatpush1.bf16.msra.mxu0 %v318
        %322 = vmatprep.subr.bf16.mxu0 0
        %323 = vmatpush1.bf16.msra.mxu0 0
        %324 = vmatprep.subr.bf16.mxu0 0
        %325 = vmatpush1.bf16.msra.mxu0 0
        %326 = vmatprep.subr.bf16.mxu0 0
        %327 = vmatpush1.bf16.msra.mxu0 0
        %328 = vmatprep.subr.bf16.mxu0 0
        %329 = vmatpush1.bf16.msra.mxu0 0
        %330 = vmatprep.subr.bf16.mxu0 0
        %331 = vmatpush1.bf16.msra.mxu0 0
        %332 = vmatprep.subr.bf16.mxu0 0
        %333 = vmatpush1.bf16.msra.mxu0 0
        %334 = vmatprep.subr.bf16.mxu0 0
        %335 = vmatpush1.bf16.msra.mxu0 0
        %336 = vmatprep.subr.bf16.mxu0 0
        %337 = vmatpush1.bf16.msra.mxu0 0
        %338 = vmatprep.subr.bf16.mxu0 0
        %339 = vmatpush1.bf16.msra.mxu0 0
        %340 = vmatprep.subr.bf16.mxu0 0
        %341 = vmatpush1.bf16.msra.mxu0 0
        %342 = vmatprep.subr.bf16.mxu0 0
        %343 = vmatpush1.bf16.msra.mxu0 0
        %344 = vmatprep.subr.bf16.mxu0 0
        %345 = vmatpush1.bf16.msra.mxu0 0
        %346 = vmatprep.subr.bf16.mxu0 0
        %347 = vmatpush1.bf16.msra.mxu0 0
        %348 = vmatprep.subr.bf16.mxu0 0
        %349 = vmatpush1.bf16.msra.mxu0 0
        %350 = vmatprep.subr.bf16.mxu0 0
        %351 = vmatpush1.bf16.msra.mxu0 0
        %352 = vmatprep.mubr.bf16.mxu0 0
        %353 = vmatmul.mubr.bf16.gmra.mrb[0].mxu0 %v305
        %v354 = vpop.f32.mrb[0].mxu0
        %v355 = vadd.f32 0.0, %v354
        %v356 = vpop.f32.mrb[0].mxu0
        %v357 = vpop.f32.mrb[0].mxu0
        %v358 = vadd.f32 0.0, %v357
        %v359 = vpop.f32.mrb[0].mxu0
        %360 = vmatprep.mubr.bf16.mxu0 0
        %361 = vmatmul.mubr.bf16.gmra.mrb[0].mxu0 %v308
        %v362 = vpop.f32.mrb[0].mxu0
        %v363 = vadd.f32 0.0, %v362
        %v364 = vpop.f32.mrb[0].mxu0
        %v365 = vpop.f32.mrb[0].mxu0
        %v366 = vadd.f32 0.0, %v365
        %v367 = vpop.f32.mrb[0].mxu0
        %368 = vmatprep.mubr.bf16.mxu0 0
        %369 = vmatmul.mubr.bf16.gmra.mrb[0].mxu0 %v311
        %v370 = vpop.f32.mrb[0].mxu0
        %v371 = vadd.f32 0.0, %v370
        %v372 = vpop.f32.mrb[0].mxu0
        %v373 = vpop.f32.mrb[0].mxu0
        %v374 = vadd.f32 0.0, %v373
        %v375 = vpop.f32.mrb[0].mxu0
        %376 = vmatprep.mubr.bf16.mxu0 0
        %377 = vmatmul.mubr.bf16.gmra.mrb[0].mxu0 %v314
        %v378 = vpop.f32.mrb[0].mxu0
        %v379 = vadd.f32 0.0, %v378
        %v380 = vpop.f32.mrb[0].mxu0
        %v381 = vpop.f32.mrb[0].mxu0
        %v382 = vadd.f32 0.0, %v381
        %v383 = vpop.f32.mrb[0].mxu0
        %384 = vdwg.mxu0
        %v385 = vpack.c.bf16 %v358, %v355
        %v386 = vpack.c.bf16 %v366, %v363
        %v387 = vpack.c.bf16 %v374, %v371
        %v388 = vpack.c.bf16 %v382, %v379
        %v393 = vunpack.c.l.b16 %v385
        %v394 = vunpack.c.h.b16 %v385
        %v395 = vunpack.c.l.b16 %v386
        %v396 = vunpack.c.h.b16 %v386
        %v397 = vunpack.c.l.b16 %v387
        %v398 = vunpack.c.h.b16 %v387
        %v399 = vunpack.c.l.b16 %v388
        %v400 = vunpack.c.h.b16 %v388
        %v401 = vpack.c.b16 %v393, %v393
        %v402 = vpack.c.b16 %v394, %v394
        %v403 = vpack.c.b16 %v395, %v395
        %v404 = vpack.c.b16 %v396, %v396
        %v405 = vpack.c.b16 %v397, %v397
        %v406 = vpack.c.b16 %v398, %v398
        %v407 = vpack.c.b16 %v399, %v399
        %v408 = vpack.c.b16 %v400, %v400
        %vm417 = vcmask 125952
        %418 = vst.msk [vmem:[%s281] sm:$0xf] %vm417, %v401
        %419 = vst.msk [vmem:[%s281 + $0x4] sm:$0xf] %vm417, %v402
        %420 = vst.msk [vmem:[%s281 + $0x8] sm:$0xf] %vm417, %v403
        %421 = vst.msk [vmem:[%s281 + $0xc] sm:$0xf] %vm417, %v404
        %422 = vst.msk [vmem:[%s281 + $0x10] sm:$0xf] %vm417, %v405
        %423 = vst.msk [vmem:[%s281 + $0x14] sm:$0xf] %vm417, %v406
        %424 = vst.msk [vmem:[%s281 + $0x18] sm:$0xf] %vm417, %v407
        %425 = vst.msk [vmem:[%s281 + $0x1c] sm:$0xf] %vm417, %v408
        %vm426 = vcmask 130048
        %427 = vst.msk [vmem:[%s263] sm:$0xff] %vm426, 0.0
        %v428 = vsel %vm426, %v355, 0.0
        %v429 = vsel %vm426, %v358, 0.0
        %v430 = vadd.f32 %v428, %v429
        %v431 = vsel %vm426, %v363, 0.0
        %v432 = vadd.f32 %v430, %v431
        %v433 = vsel %vm426, %v366, 0.0
        %v434 = vadd.f32 %v432, %v433
        %v435 = vsel %vm426, %v371, 0.0
        %v436 = vadd.f32 %v434, %v435
        %v437 = vsel %vm426, %v374, 0.0
        %v438 = vadd.f32 %v436, %v437
        %v439 = vsel %vm426, %v379, 0.0
        %v440 = vadd.f32 %v438, %v439
        %v441 = vsel %vm426, %v382, 0.0
        %v442 = vadd.f32 %v440, %v441
        %v443 = vrot.slane %v442, 4
        %v444 = vadd.f32 %v442, %v443
        %v445 = vrot.slane %v444, 2
        %v446 = vadd.f32 %v444, %v445
        %v447 = vrot.slane %v446, 1
        %v448 = vadd.f32 %v446, %v447
        %vm449 = vcmask 122880
        %450 = vst.msk [vmem:[%s263] sm:$0x1] %vm449, %v448
        %v451 = vmul.f32 %v355, %v355
        %v452 = vmul.f32 %v358, %v358
        %v453 = vmul.f32 %v363, %v363
        %v454 = vmul.f32 %v366, %v366
        %v455 = vmul.f32 %v371, %v371
        %v456 = vmul.f32 %v374, %v374
        %v457 = vmul.f32 %v379, %v379
        %v458 = vmul.f32 %v382, %v382
        %v459 = vsel %vm426, %v451, 0.0
        %v460 = vsel %vm426, %v452, 0.0
        %v461 = vadd.f32 %v459, %v460
        %v462 = vsel %vm426, %v453, 0.0
        %v463 = vadd.f32 %v461, %v462
        %v464 = vsel %vm426, %v454, 0.0
        %v465 = vadd.f32 %v463, %v464
        %v466 = vsel %vm426, %v455, 0.0
        %v467 = vadd.f32 %v465, %v466
        %v468 = vsel %vm426, %v456, 0.0
        %v469 = vadd.f32 %v467, %v468
        %v470 = vsel %vm426, %v457, 0.0
        %v471 = vadd.f32 %v469, %v470
        %v472 = vsel %vm426, %v458, 0.0
        %v473 = vadd.f32 %v471, %v472
        %v474 = vrot.slane %v473, 4
        %v475 = vadd.f32 %v473, %v474
        %v476 = vrot.slane %v475, 2
        %v477 = vadd.f32 %v475, %v476
        %v478 = vrot.slane %v477, 1
        %v479 = vadd.f32 %v477, %v478
        %480 = vst.msk [vmem:[%s263 + $0x1] sm:$0x1] %vm449, %v479
        %v481 = vld [vmem:[%s2] sm:$0xf]
        %v483 = vsel %vm316, %v481, 0
        %485 = vmatprep.subr.bf16.mxu0 0
        %486 = vmatpush1.bf16.msra.mxu0 %v483
        %487 = vmatprep.subr.bf16.mxu0 0
        %488 = vmatpush1.bf16.msra.mxu0 0
        %489 = vmatprep.subr.bf16.mxu0 0
        %490 = vmatpush1.bf16.msra.mxu0 0
        %491 = vmatprep.subr.bf16.mxu0 0
        %492 = vmatpush1.bf16.msra.mxu0 0
        %493 = vmatprep.subr.bf16.mxu0 0
        %494 = vmatpush1.bf16.msra.mxu0 0
        %495 = vmatprep.subr.bf16.mxu0 0
        %496 = vmatpush1.bf16.msra.mxu0 0
        %497 = vmatprep.subr.bf16.mxu0 0
        %498 = vmatpush1.bf16.msra.mxu0 0
        %499 = vmatprep.subr.bf16.mxu0 0
        %500 = vmatpush1.bf16.msra.mxu0 0
        %501 = vmatprep.subr.bf16.mxu0 0
        %502 = vmatpush1.bf16.msra.mxu0 0
        %503 = vmatprep.subr.bf16.mxu0 0
        %504 = vmatpush1.bf16.msra.mxu0 0
        %505 = vmatprep.subr.bf16.mxu0 0
        %506 = vmatpush1.bf16.msra.mxu0 0
        %507 = vmatprep.subr.bf16.mxu0 0
        %508 = vmatpush1.bf16.msra.mxu0 0
        %509 = vmatprep.subr.bf16.mxu0 0
        %510 = vmatpush1.bf16.msra.mxu0 0
        %511 = vmatprep.subr.bf16.mxu0 0
        %512 = vmatpush1.bf16.msra.mxu0 0
        %513 = vmatprep.subr.bf16.mxu0 0
        %514 = vmatpush1.bf16.msra.mxu0 0
        %515 = vmatprep.subr.bf16.mxu0 0
        %516 = vmatpush1.bf16.msra.mxu0 0
        %517 = vmatprep.mubr.bf16.mxu0 0
        %518 = vmatmul.mubr.bf16.gmra.mrb[0].mxu0 %v305
        %v519 = vpop.f32.mrb[0].mxu0
        %v520 = vadd.f32 0.0, %v519
        %v521 = vpop.f32.mrb[0].mxu0
        %v522 = vpop.f32.mrb[0].mxu0
        %v523 = vadd.f32 0.0, %v522
        %v524 = vpop.f32.mrb[0].mxu0
        %525 = vmatprep.mubr.bf16.mxu0 0
        %526 = vmatmul.mubr.bf16.gmra.mrb[0].mxu0 %v308
        %v527 = vpop.f32.mrb[0].mxu0
        %v528 = vadd.f32 0.0, %v527
        %v529 = vpop.f32.mrb[0].mxu0
        %v530 = vpop.f32.mrb[0].mxu0
        %v531 = vadd.f32 0.0, %v530
        %v532 = vpop.f32.mrb[0].mxu0
        %533 = vmatprep.mubr.bf16.mxu0 0
        %534 = vmatmul.mubr.bf16.gmra.mrb[0].mxu0 %v311
        %v535 = vpop.f32.mrb[0].mxu0
        %v536 = vadd.f32 0.0, %v535
        %v537 = vpop.f32.mrb[0].mxu0
        %v538 = vpop.f32.mrb[0].mxu0
        %v539 = vadd.f32 0.0, %v538
        %v540 = vpop.f32.mrb[0].mxu0
        %541 = vmatprep.mubr.bf16.mxu0 0
        %542 = vmatmul.mubr.bf16.gmra.mrb[0].mxu0 %v314
        %v543 = vpop.f32.mrb[0].mxu0
        %v544 = vadd.f32 0.0, %v543
        %v545 = vpop.f32.mrb[0].mxu0
        %v546 = vpop.f32.mrb[0].mxu0
        %v547 = vadd.f32 0.0, %v546
        %v548 = vpop.f32.mrb[0].mxu0
        %549 = vdwg.mxu0
        %v550 = vpack.c.bf16 %v523, %v520
        %v551 = vpack.c.bf16 %v531, %v528
        %v552 = vpack.c.bf16 %v539, %v536
        %v553 = vpack.c.bf16 %v547, %v544
        %v558 = vunpack.c.l.b16 %v550
        %v559 = vunpack.c.h.b16 %v550
        %v560 = vunpack.c.l.b16 %v551
        %v561 = vunpack.c.h.b16 %v551
        %v562 = vunpack.c.l.b16 %v552
        %v563 = vunpack.c.h.b16 %v552
        %v564 = vunpack.c.l.b16 %v553
        %v565 = vunpack.c.h.b16 %v553
        %v566 = vpack.c.b16 %v558, %v558
        %v567 = vpack.c.b16 %v559, %v559
        %v568 = vpack.c.b16 %v560, %v560
        %v569 = vpack.c.b16 %v561, %v561
        %v570 = vpack.c.b16 %v562, %v562
        %v571 = vpack.c.b16 %v563, %v563
        %v572 = vpack.c.b16 %v564, %v564
        %v573 = vpack.c.b16 %v565, %v565
        %582 = vst.msk [vmem:[%s287] sm:$0xf] %vm417, %v566
        %583 = vst.msk [vmem:[%s287 + $0x4] sm:$0xf] %vm417, %v567
        %584 = vst.msk [vmem:[%s287 + $0x8] sm:$0xf] %vm417, %v568
        %585 = vst.msk [vmem:[%s287 + $0xc] sm:$0xf] %vm417, %v569
        %586 = vst.msk [vmem:[%s287 + $0x10] sm:$0xf] %vm417, %v570
        %587 = vst.msk [vmem:[%s287 + $0x14] sm:$0xf] %vm417, %v571
        %588 = vst.msk [vmem:[%s287 + $0x18] sm:$0xf] %vm417, %v572
        %589 = vst.msk [vmem:[%s287 + $0x1c] sm:$0xf] %vm417, %v573
        %590 = vst.msk [vmem:[%s270] sm:$0xff] %vm426, 0.0
        %v591 = vsel %vm426, %v520, 0.0
        %v592 = vsel %vm426, %v523, 0.0
        %v593 = vadd.f32 %v591, %v592
        %v594 = vsel %vm426, %v528, 0.0
        %v595 = vadd.f32 %v593, %v594
        %v596 = vsel %vm426, %v531, 0.0
        %v597 = vadd.f32 %v595, %v596
        %v598 = vsel %vm426, %v536, 0.0
        %v599 = vadd.f32 %v597, %v598
        %v600 = vsel %vm426, %v539, 0.0
        %v601 = vadd.f32 %v599, %v600
        %v602 = vsel %vm426, %v544, 0.0
        %v603 = vadd.f32 %v601, %v602
        %v604 = vsel %vm426, %v547, 0.0
        %v605 = vadd.f32 %v603, %v604
        %v606 = vrot.slane %v605, 4
        %v607 = vadd.f32 %v605, %v606
        %v608 = vrot.slane %v607, 2
        %v609 = vadd.f32 %v607, %v608
        %v610 = vrot.slane %v609, 1
        %v611 = vadd.f32 %v609, %v610
        %612 = vst.msk [vmem:[%s270] sm:$0x1] %vm449, %v611
        %v613 = vmul.f32 %v520, %v520
        %v614 = vmul.f32 %v523, %v523
        %v615 = vmul.f32 %v528, %v528
        %v616 = vmul.f32 %v531, %v531
        %v617 = vmul.f32 %v536, %v536
        %v618 = vmul.f32 %v539, %v539
        %v619 = vmul.f32 %v544, %v544
        %v620 = vmul.f32 %v547, %v547
        %v621 = vsel %vm426, %v613, 0.0
        %v622 = vsel %vm426, %v614, 0.0
        %v623 = vadd.f32 %v621, %v622
        %v624 = vsel %vm426, %v615, 0.0
        %v625 = vadd.f32 %v623, %v624
        %v626 = vsel %vm426, %v616, 0.0
        %v627 = vadd.f32 %v625, %v626
        %v628 = vsel %vm426, %v617, 0.0
        %v629 = vadd.f32 %v627, %v628
        %v630 = vsel %vm426, %v618, 0.0
        %v631 = vadd.f32 %v629, %v630
        %v632 = vsel %vm426, %v619, 0.0
        %v633 = vadd.f32 %v631, %v632
        %v634 = vsel %vm426, %v620, 0.0
        %v635 = vadd.f32 %v633, %v634
        %v636 = vrot.slane %v635, 4
        %v637 = vadd.f32 %v635, %v636
        %v638 = vrot.slane %v637, 2
        %v639 = vadd.f32 %v637, %v638
        %v640 = vrot.slane %v639, 1
        %v641 = vadd.f32 %v639, %v640
        %642 = vst.msk [vmem:[%s270 + $0x1] sm:$0x1] %vm449, %v641
        %s643 = smul.u32 8, %s24
        %p644 = scmp.lt.s32.totalorder %s643, 15
        %s645 = scalar_select %p644, %s643, 15
        %s646 = smul.addr %s645, 4
        %s647 = scalar_lea.vmem %s3, %s646
        %s648 = smul.u32 8, %s24
        %p649 = scmp.lt.s32.totalorder %s648, 15
        %s650 = scalar_select %p649, %s648, 15
        %s651 = smul.addr %s650, 4
        %s652 = scalar_lea.vmem %s4, %s651
        %s653 = sand.u32 %s152, 1
        %s654 = scalar_lea.sflag [#allocation3], %s653
        %s655 = sand.u32 %s152, 1
        %s656 = smul.addr %s655, 8
        %s657 = scalar_lea.vmem [#allocation2], %s656
        %s658 = sand.u32 %s178, 1
        %s659 = scalar_lea.sflag [#allocation5], %s658
        %s660 = sand.u32 %s178, 1
        %s661 = smul.addr %s660, 8
        %s662 = scalar_lea.vmem [#allocation4], %s661
        // Predicated region
        $region33: #{tpu_custom_call.1} parent=31 // pred_check
          %p663 = pneg %p110
        $region34: #{tpu_custom_call.1} parent=31 // pred_check_branch
          %665 = sbr.rel (%p663) target = $region36
        $region35: #{tpu_custom_call.1} parent=31 // pred_region
          %s666 = smul.u32 8, %s24
        $region36: #{tpu_custom_call.1} parent=31 // pred_fallthru
          _
        // Predicated region
        $region37: #{tpu_custom_call.1} parent=31 // pred_check
          %p667 = pneg %p136
        $region38: #{tpu_custom_call.1} parent=31 // pred_check_branch
          %669 = sbr.rel (%p667) target = $region40
        $region39: #{tpu_custom_call.1} parent=31 // pred_region
          %s670 = smul.u32 8, %s24
        $region40: #{tpu_custom_call.1} parent=31 // pred_fallthru
          _
        // Predicated region
        $region41: #{tpu_custom_call.1} parent=31 // pred_check
          %p671 = pneg %p162
        $region42: #{tpu_custom_call.1} parent=31 // pred_check_branch
          %673 = sbr.rel (%p671) target = $region44
        $region43: #{tpu_custom_call.1} parent=31 // pred_region
          %s675 = ssub.s32 128, 128
          %676 = vsyncadd %s654, %s675
          %s677 = smul.addr %s24, 128
          %s678 = scalar_lea.hbm %s5, %s677
          %s680 = sshll.u32 %s657, 4
          %s681 = int_to_ptr.vmem [resolvable:$true] %s680
          %683 = dma.vmem_to_hbm [thread:$0]  %s681, 128, %s678, %s654
        $region44: #{tpu_custom_call.1} parent=31 // pred_fallthru
          _
        // Predicated region
        $region45: #{tpu_custom_call.1} parent=31 // pred_check
          %p684 = pneg %p188
        $region46: #{tpu_custom_call.1} parent=31 // pred_check_branch
          %686 = sbr.rel (%p684) target = $region48
        $region47: #{tpu_custom_call.1} parent=31 // pred_region
          %s688 = ssub.s32 128, 128
          %689 = vsyncadd %s659, %s688
          %s690 = smul.addr %s24, 128
          %s691 = scalar_lea.hbm %s6, %s690
          %s693 = sshll.u32 %s662, 4
          %s694 = int_to_ptr.vmem [resolvable:$true] %s693
          %696 = dma.vmem_to_hbm [thread:$0]  %s694, 128, %s691, %s659
        $region48: #{tpu_custom_call.1} parent=31 // pred_fallthru
          _
      $region32: #{tpu_custom_call.1} parent=5 // pred_fallthru
        _
      %p697 = scmp.le.s32.totalorder 2, %s19
      // Predicated region
      $region49: #{tpu_custom_call.1} parent=5 // pred_check
        %p698 = pneg %p697
      $region50: #{tpu_custom_call.1} parent=5 // pred_check_branch
        %700 = sbr.rel (%p698) target = $region52
      $region51: #{tpu_custom_call.1} parent=5 // pred_region
        %s701 = ssub.s32 %s19, 2
        // Predicated region
        $region53: #{tpu_custom_call.1} parent=51 // pred_check
          %p702 = pneg %p116
        $region54: #{tpu_custom_call.1} parent=51 // pred_check_branch
          %704 = sbr.rel (%p702) target = $region56
        $region55: #{tpu_custom_call.1} parent=51 // pred_region
          %s705 = smul.u32 8, %s25
          %p706 = scmp.lt.s32.totalorder %s705, 15
          %s707 = scalar_select %p706, %s705, 15
          %s708 = smul.addr %s707, 4
          %s709 = scalar_lea.vmem %s3, %s708
        $region56: #{tpu_custom_call.1} parent=51 // pred_fallthru
          _
        // Predicated region
        $region57: #{tpu_custom_call.1} parent=51 // pred_check
          %p710 = pneg %p142
        $region58: #{tpu_custom_call.1} parent=51 // pred_check_branch
          %712 = sbr.rel (%p710) target = $region60
        $region59: #{tpu_custom_call.1} parent=51 // pred_region
          %s713 = smul.u32 8, %s25
          %p714 = scmp.lt.s32.totalorder %s713, 15
          %s715 = scalar_select %p714, %s713, 15
          %s716 = smul.addr %s715, 4
          %s717 = scalar_lea.vmem %s4, %s716
        $region60: #{tpu_custom_call.1} parent=51 // pred_fallthru
          _
        // Predicated region
        $region61: #{tpu_custom_call.1} parent=51 // pred_check
          %p718 = pneg %p168
        $region62: #{tpu_custom_call.1} parent=51 // pred_check_branch
          %720 = sbr.rel (%p718) target = $region64
        $region63: #{tpu_custom_call.1} parent=51 // pred_region
          %s721 = sand.u32 %s153, 1
          %s722 = scalar_lea.sflag [#allocation3], %s721
          %s723 = sand.u32 %s153, 1
          %s724 = smul.addr %s723, 8
          %s725 = scalar_lea.vmem [#allocation2], %s724
          %726 = dma.done %s722, 128
        $region64: #{tpu_custom_call.1} parent=51 // pred_fallthru
          _
        // Predicated region
        $region65: #{tpu_custom_call.1} parent=51 // pred_check
          %p727 = pneg %p194
        $region66: #{tpu_custom_call.1} parent=51 // pred_check_branch
          %729 = sbr.rel (%p727) target = $region68
        $region67: #{tpu_custom_call.1} parent=51 // pred_region
          %s730 = sand.u32 %s179, 1
          %s731 = scalar_lea.sflag [#allocation5], %s730
          %s732 = sand.u32 %s179, 1
          %s733 = smul.addr %s732, 8
          %s734 = scalar_lea.vmem [#allocation4], %s733
          %735 = dma.done %s731, 128
        $region68: #{tpu_custom_call.1} parent=51 // pred_fallthru
          _
      $region52: #{tpu_custom_call.1} parent=5 // pred_fallthru
        _
    $region6: #{tpu_custom_call.1} parent=1 // loop_footer
      %s23 = sadd.s32 1, %s19
    $region7: #{tpu_custom_call.1} parent=1 // loop_footer_branch
      %18 = sbr.rel target = $region3
    $region8: #{tpu_custom_call.1} parent=1 // loop_exit
      _
    %736 = vsyncpa [#allocation3], 1
    %s737 = scalar_lea.sflag [#allocation3], 1
    %738 = vsyncpa %s737, 1
    %739 = vsyncpa [#allocation5], 1
    %s740 = scalar_lea.sflag [#allocation5], 1
    %741 = vsyncpa %s740, 1

</llo_original>
